<compile_context>
chip_gen: v7x
topology: tpu7x:2x2x1
jax: 0.10.0
libtpu: 0.0.40
codegen_flags: <defaults>
</compile_context>

<pallas_src>
import numpy as np
import jax
import jax.numpy as jnp
from jax.experimental import pallas as pl
from jax.experimental.pallas import tpu as pltpu


def _cdiv(a, b):
    return -(-a // b)


_Y_COEF = (65.481, 128.553, 24.966)  # fixed Y-channel coefficients from the module


def _make_ssd_kernel(n_chan, coef, post_add, post_scale):
    """Kernel computing per-sample sum of squared differences, with an optional fused
    per-channel affine combine (used for the toY path). All math in f32."""
    coef = tuple(float(c) for c in coef)
    post_add = float(post_add)
    post_scale = float(post_scale)

    def kernel(pred_ref, targ_ref, out_ref, acc_ref):
        # pred_ref/targ_ref: (1, n_chan, rb, 8, 128) block of the reshaped input
        # out_ref:           (1, 8, 128) per-sample SSD broadcast (lane-dense store)
        # acc_ref:           (8, 128) f32 scratch accumulator (vreg-shaped partials)
        t = pl.program_id(1)

        @pl.when(t == 0)
        def _():
            acc_ref[...] = jnp.zeros_like(acc_ref)

        def combine(ref):
            y = ref[0, 0].astype(jnp.float32) * coef[0]
            for c in range(1, n_chan):
                y = y + ref[0, c].astype(jnp.float32) * coef[c]
            return (y + post_add) * post_scale

        d = combine(pred_ref) - combine(targ_ref)          # (rb, 8, 128) f32
        # Per-step: plain VALU adds into a vreg-shaped accumulator (no XLU in steady state).
        acc_ref[...] += jnp.sum(d * d, axis=0)              # -> (8, 128)

        @pl.when(t == pl.num_programs(1) - 1)
        def _():
            # Single cross-sublane + cross-lane reduce in the epilogue.
            out_ref[...] = jnp.broadcast_to(jnp.sum(acc_ref[...]), out_ref.shape)

    return kernel


def _per_sample_ssd(pred3, targ3, coef, post_add, post_scale, *, block_bytes=1 << 20):
    """pred3/targ3: (N, C, M) per-channel-flattened inputs. Returns (N,) f32 per-sample SSD
    of combine(pred) - combine(targ), where combine = (sum_c coef[c]*x[c] + add) * scale."""
    N, C, M = pred3.shape

    itemsize = 4  # budget blocks assuming f32; narrower input dtypes only use less VMEM
    R = _cdiv(M, 8 * 128)                                   # (8,128) vregs per channel
    rb_max = max(1, block_bytes // (C * 8 * 128 * itemsize))
    grid_t = _cdiv(R, rb_max)                               # reduction steps
    rb = _cdiv(R, grid_t)                                   # vreg-rows per step (<= rb_max)
    R_pad = rb * grid_t

    pad = R_pad * 8 * 128 - M
    if pad:
        # Zero-pad the tail: identical zeros in pred/target -> diff == 0 -> SSD unchanged.
        pred3 = jnp.pad(pred3, ((0, 0), (0, 0), (0, pad)))
        targ3 = jnp.pad(targ3, ((0, 0), (0, 0), (0, pad)))

    pred5 = pred3.reshape(N, C, R_pad, 8, 128)
    targ5 = targ3.reshape(N, C, R_pad, 8, 128)

    kernel = _make_ssd_kernel(C, coef, post_add, post_scale)

    out = pl.pallas_call(
        kernel,
        out_shape=jax.ShapeDtypeStruct((N, 8, 128), jnp.float32),
        grid_spec=pltpu.PrefetchScalarGridSpec(
            num_scalar_prefetch=0,
            grid=(N, grid_t),
            in_specs=[
                pl.BlockSpec((1, C, rb, 8, 128), lambda i, t: (i, 0, t, 0, 0)),
                pl.BlockSpec((1, C, rb, 8, 128), lambda i, t: (i, 0, t, 0, 0)),
            ],
            out_specs=pl.BlockSpec((1, 8, 128), lambda i, t: (i, 0, 0)),
            scratch_shapes=[pltpu.VMEM((8, 128), jnp.float32)],
        ),
        compiler_params=pltpu.CompilerParams(
            # batch axis parallel (uses both v7x TensorCores), reduction axis arbitrary
            dimension_semantics=("parallel", "arbitrary"),
            # explicit scoped-VMEM budget: well above what ~1 MiB double-buffered blocks
            # need, and within every generation's physical VMEM (incl. v7x's 64 MiB).
            vmem_limit_bytes=32 * 1024 * 1024,
        ),
    )(pred5, targ5)

    return out[:, 0, 0]  # (N,)


def psnr_loss(pred, target, loss_weight=0.5, toY=False):
    """JAX/Pallas equivalent of PSNRLoss.forward. pred/target: (N, C, H, W)."""
    assert pred.ndim == 4
    N, C, H, W = pred.shape
    scale = 10.0 / np.log(10.0)

    if toY:
        assert C == 3, "toY=True requires 3 input channels (RGB)"
        # Y conversion fused into the kernel (raw RGB blocks read; coefs applied in f32).
        coef, post_add, post_scale = _Y_COEF, 16.0, 1.0 / 255.0
        D = H * W                                   # mean is over the (1, H, W) Y image
        p = pred.reshape(N, 3, H * W)
        q = target.reshape(N, 3, H * W)
    else:
        coef, post_add, post_scale = (1.0,), 0.0, 1.0
        D = C * H * W
        p = pred.reshape(N, 1, C * H * W)
        q = target.reshape(N, 1, C * H * W)

    ssd = _per_sample_ssd(p, q, coef, post_add, post_scale)   # (N,)
    mse = ssd / jnp.float32(D)                                # mean over (C, H, W)
    return loss_weight * scale * jnp.mean(jnp.log(mse + 1e-8))


def psnr_loss_ref(pred, target, loss_weight=0.5, toY=False):
    """Pure-JAX reference matching the PyTorch forward."""
    scale = 10.0 / np.log(10.0)
    if toY:
        coef = jnp.array(_Y_COEF, dtype=jnp.float32).reshape(1, 3, 1, 1)
        pred = jnp.sum(pred.astype(jnp.float32) * coef, axis=1, keepdims=True) + 16.0
        target = jnp.sum(target.astype(jnp.float32) * coef, axis=1, keepdims=True) + 16.0
        pred = pred / 255.0
        target = target / 255.0
    mse = jnp.mean((pred - target) ** 2, axis=(1, 2, 3))
    return loss_weight * scale * jnp.mean(jnp.log(mse + 1e-8))


if __name__ == "__main__":
    key = jax.random.PRNGKey(0)
    k1, k2, k3, k4 = jax.random.split(key, 4)

    # Default path (toY=False), shapes consistent with the module.
    N, C, H, W = 2, 4, 16, 16
    pred = jax.random.uniform(k1, (N, C, H, W), dtype=jnp.float32)
    target = jax.random.uniform(k2, (N, C, H, W), dtype=jnp.float32)
    out = jax.block_until_ready(psnr_loss(pred, target, loss_weight=0.5, toY=False))
    ref = jax.block_until_ready(psnr_loss_ref(pred, target, loss_weight=0.5, toY=False))
    np.testing.assert_allclose(np.asarray(out), np.asarray(ref), rtol=1e-5, atol=1e-5)

    # Fused toY path (3-channel RGB).
    predY = jax.random.uniform(k3, (2, 3, 16, 16), dtype=jnp.float32)
    targY = jax.random.uniform(k4, (2, 3, 16, 16), dtype=jnp.float32)
    outY = jax.block_until_ready(psnr_loss(predY, targY, loss_weight=0.5, toY=True))
    refY = jax.block_until_ready(psnr_loss_ref(predY, targY, loss_weight=0.5, toY=True))
    np.testing.assert_allclose(np.asarray(outY), np.asarray(refY), rtol=1e-5, atol=1e-5)

    print("KERNEL_OK")
</pallas_src>

<mosaic_0001>
module attributes {stable_mosaic.version = 11 : i64} {
  func.func @kernel(%arg0: i32, %arg1: i32, %arg2: memref<1x1x1x8x128xf32, #tpu.memory_space<vmem>>, %arg3: memref<1x1x1x8x128xf32, #tpu.memory_space<vmem>>, %arg4: memref<1x8x128xf32, #tpu.memory_space<vmem>>, %arg5: memref<8x128xf32, #tpu.memory_space<vmem>>) attributes {dimension_semantics = [#tpu.dimension_semantics<parallel>, #tpu.dimension_semantics<arbitrary>], iteration_bounds = array<i64: 2, 1>, scalar_prefetch = 0 : i64, scratch_operands = 1 : i64, tpu.core_type = #tpu.core_type<tc>, window_params = [{transform_indices = @transform_0, window_bounds = array<i64: 1, 1, 1, 8, 128>}, {transform_indices = @transform_1, window_bounds = array<i64: 1, 1, 1, 8, 128>}, {transform_indices = @transform_2, window_bounds = array<i64: 1, 8, 128>}]} {
    %c0_i32 = arith.constant 0 : i32
    %0 = arith.cmpi eq, %arg1, %c0_i32 : i32
    %1 = arith.extui %0 : i1 to i32
    %c0_i32_0 = arith.constant 0 : i32
    %2 = arith.cmpi ne, %1, %c0_i32_0 : i32
    scf.if %2 {
      %cst_22 = arith.constant 0.000000e+00 : f32
      %28 = vector.broadcast %cst_22 : f32 to vector<8x128xf32>
      %c0_23 = arith.constant 0 : index
      %c0_24 = arith.constant 0 : index
      %29 = vector.load %arg5[%c0_23, %c0_24] : memref<8x128xf32, #tpu.memory_space<vmem>>, vector<8x128xf32>
      tpu.vector_store %arg5[%c0_23, %c0_24], %28 {strides = array<i32>} : memref<8x128xf32, #tpu.memory_space<vmem>>, vector<8x128xf32>,
    } else {
    }
    %c0 = arith.constant 0 : index
    %c0_1 = arith.constant 0 : index
    %c0_2 = arith.constant 0 : index
    %c0_3 = arith.constant 0 : index
    %c0_4 = arith.constant 0 : index
    %3 = vector.load %arg2[%c0, %c0_1, %c0_2, %c0_3, %c0_4] : memref<1x1x1x8x128xf32, #tpu.memory_space<vmem>>, vector<1x1x1x8x128xf32>
    %4 = vector.shape_cast %3 : vector<1x1x1x8x128xf32> to vector<1x8x128xf32>
    %cst = arith.constant 1.000000e+00 : f32
    %5 = vector.broadcast %cst : f32 to vector<1x8x128xf32>
    %6 = arith.mulf %4, %5 : vector<1x8x128xf32>
    %cst_5 = arith.constant 0.000000e+00 : f32
    %7 = vector.broadcast %cst_5 : f32 to vector<1x8x128xf32>
    %8 = arith.addf %6, %7 : vector<1x8x128xf32>
    %cst_6 = arith.constant 1.000000e+00 : f32
    %9 = vector.broadcast %cst_6 : f32 to vector<1x8x128xf32>
    %10 = arith.mulf %8, %9 : vector<1x8x128xf32>
    %c0_7 = arith.constant 0 : index
    %c0_8 = arith.constant 0 : index
    %c0_9 = arith.constant 0 : index
    %c0_10 = arith.constant 0 : index
    %c0_11 = arith.constant 0 : index
    %11 = vector.load %arg3[%c0_7, %c0_8, %c0_9, %c0_10, %c0_11] : memref<1x1x1x8x128xf32, #tpu.memory_space<vmem>>, vector<1x1x1x8x128xf32>
    %12 = vector.shape_cast %11 : vector<1x1x1x8x128xf32> to vector<1x8x128xf32>
    %cst_12 = arith.constant 1.000000e+00 : f32
    %13 = vector.broadcast %cst_12 : f32 to vector<1x8x128xf32>
    %14 = arith.mulf %12, %13 : vector<1x8x128xf32>
    %cst_13 = arith.constant 0.000000e+00 : f32
    %15 = vector.broadcast %cst_13 : f32 to vector<1x8x128xf32>
    %16 = arith.addf %14, %15 : vector<1x8x128xf32>
    %cst_14 = arith.constant 1.000000e+00 : f32
    %17 = vector.broadcast %cst_14 : f32 to vector<1x8x128xf32>
    %18 = arith.mulf %16, %17 : vector<1x8x128xf32>
    %19 = arith.subf %10, %18 : vector<1x8x128xf32>
    %c0_15 = arith.constant 0 : index
    %c0_16 = arith.constant 0 : index
    %20 = vector.load %arg5[%c0_15, %c0_16] : memref<8x128xf32, #tpu.memory_space<vmem>>, vector<8x128xf32>
    %21 = arith.mulf %19, %19 : vector<1x8x128xf32>
    %cst_17 = arith.constant dense<0.000000e+00> : vector<8x128xf32>
    %22 = vector.multi_reduction <add>, %21, %cst_17 [0] : vector<1x8x128xf32> to vector<8x128xf32>
    %23 = arith.addf %20, %22 : vector<8x128xf32>
    %c0_18 = arith.constant 0 : index
    %c0_19 = arith.constant 0 : index
    %24 = vector.load %arg5[%c0_18, %c0_19] : memref<8x128xf32, #tpu.memory_space<vmem>>, vector<8x128xf32>
    tpu.vector_store %arg5[%c0_18, %c0_19], %23 {strides = array<i32>} : memref<8x128xf32, #tpu.memory_space<vmem>>, vector<8x128xf32>,
    %c0_i32_20 = arith.constant 0 : i32
    %25 = arith.cmpi eq, %arg1, %c0_i32_20 : i32
    %26 = arith.extui %25 : i1 to i32
    %c0_i32_21 = arith.constant 0 : i32
    %27 = arith.cmpi ne, %26, %c0_i32_21 : i32
    scf.if %27 {
      %c0_22 = arith.constant 0 : index
      %c0_23 = arith.constant 0 : index
      %28 = vector.load %arg5[%c0_22, %c0_23] : memref<8x128xf32, #tpu.memory_space<vmem>>, vector<8x128xf32>
      %29 = vector.shape_cast %28 : vector<8x128xf32> to vector<1x8x128xf32>
      %cst_24 = arith.constant dense<0.000000e+00> : vector<1xf32>
      %30 = vector.multi_reduction <add>, %29, %cst_24 [1, 2] : vector<1x8x128xf32> to vector<1xf32>
      %31 = vector.shape_cast %30 : vector<1xf32> to vector<1x1x1xf32>
      %32 = vector.extract %31[0, 0, 0] : f32 from vector<1x1x1xf32>
      %33 = vector.broadcast %32 : f32 to vector<1x8x128xf32>
      %c0_25 = arith.constant 0 : index
      %c0_26 = arith.constant 0 : index
      %c0_27 = arith.constant 0 : index
      %34 = vector.load %arg4[%c0_25, %c0_26, %c0_27] : memref<1x8x128xf32, #tpu.memory_space<vmem>>, vector<1x8x128xf32>
      tpu.vector_store %arg4[%c0_25, %c0_26, %c0_27], %33 {strides = array<i32>} : memref<1x8x128xf32, #tpu.memory_space<vmem>>, vector<1x8x128xf32>,
    } else {
    }
    return
  }
  func.func @transform_0(%arg0: i32, %arg1: i32) -> (i32, i32, i32, i32, i32) {
    %c0_i32 = arith.constant 0 : i32
    %c0_i32_0 = arith.constant 0 : i32
    %c0_i32_1 = arith.constant 0 : i32
    %c0_i32_2 = arith.constant 0 : i32
    return %arg0, %c0_i32, %arg1, %c0_i32_0, %c0_i32_1 : i32, i32, i32, i32, i32
  }
  func.func @transform_1(%arg0: i32, %arg1: i32) -> (i32, i32, i32, i32, i32) {
    %c0_i32 = arith.constant 0 : i32
    %c0_i32_0 = arith.constant 0 : i32
    %c0_i32_1 = arith.constant 0 : i32
    %c0_i32_2 = arith.constant 0 : i32
    return %arg0, %c0_i32, %arg1, %c0_i32_0, %c0_i32_1 : i32, i32, i32, i32, i32
  }
  func.func @transform_2(%arg0: i32, %arg1: i32) -> (i32, i32, i32) {
    %c0_i32 = arith.constant 0 : i32
    %c0_i32_0 = arith.constant 0 : i32
    %c0_i32_1 = arith.constant 0 : i32
    return %arg0, %c0_i32, %c0_i32_0 : i32, i32, i32
  }
}

</mosaic_0001>

<llo_original>
// kernel: tpu_custom_call.1
$region0: #{tpu_custom_call.1}
  #allocation0 [shape = 'u32[]', space=smem, size = 0x4, offset = 0x4, fixed_abs, tag = 'smem constant byte address 0x4 - core index']
  #allocation1 [shape = 'u32[144,128]{1,0:T(1,128)}', space=vmem, size = 0x12000, scoped, tag = 'internal scratch']
  #allocation2 [shape = 'f32[8,128]{1,0:T(8,128)}', space=vmem, size = 0x1000, scoped, tag = 'scratch operand']
  %s0 = inlined_call_operand.hbm [shape: f32[2,1,1,8,128], index: 0, kind: input, shape index: {}]
  %s1 = inlined_call_operand.hbm [shape: f32[2,1,1,8,128], index: 1, kind: input, shape index: {}]
  %s2 = inlined_call_operand.hbm [shape: f32[2,8,128], index: 2, kind: output, shape index: {}]
  %s3 = sld [smem:[#allocation0]]
  $region57: #{tpu_custom_call.1} parent=0
    _
  %s5 = ssub.s32 1, %s3
  %s6 = scalar_select 0, %s5, %s3
  $region1: #{tpu_custom_call.1} parent=0
    #allocation3 [shape = 'u8[8192]{0}', space=vmem, size = 0x2000, scoped, tag = 'input window, operand 0']
    #allocation4 [shape = 's32[2]{0}', space=sflag, size = 0x8, scoped, tag = 'scoped memory for tpu_custom_call.1']
    #allocation5 [shape = 's32[2]{0}', space=sflag, size = 0x8, scoped, tag = 'scoped memory for tpu_custom_call.1']
    #allocation6 [shape = 'u8[8192]{0}', space=vmem, size = 0x2000, scoped, tag = 'input window, operand 1']
    #allocation7 [shape = 's32[2]{0}', space=sflag, size = 0x8, scoped, tag = 'scoped memory for tpu_custom_call.1']
    #allocation8 [shape = 'u8[8192]{0}', space=vmem, size = 0x2000, scoped, tag = 'output window, operand 0']
    %7 = vsyncpa [#allocation4], 0
    %s8 = scalar_lea.sflag [#allocation4], 1
    %9 = vsyncpa %s8, 0
    %10 = vsyncpa [#allocation7], 0
    %s11 = scalar_lea.sflag [#allocation7], 1
    %12 = vsyncpa %s11, 0
    %13 = vsyncpa [#allocation5], 0
    %s14 = scalar_lea.sflag [#allocation5], 1
    %15 = vsyncpa %s14, 0
    loop: start=0, step=1, limit=4
    $region2: #{tpu_custom_call.1} parent=1 // loop_pre_header
      _
    $region3: #{tpu_custom_call.1} parent=1 // loop_header
      %s17 = sphi 0, %s21
      %p18 = scmp.ge.s32.totalorder %s17, 4
      %s24 = sphi 0, %s36
      %s25 = sphi 0, %s32
      %s26 = sphi 0, %s24
      %s27 = sphi 0, %s25
      %s28 = sphi 0, %s26
      %s29 = sphi 0, %s27
      %s41 = sphi 0, %s43
      %s44 = sphi 0, %s41
      %s45 = sphi 0, %s44
      %s61 = sphi 0, %s45
      %s69 = sphi 0, %s71
      %s72 = sphi 0, %s69
      %s73 = sphi 0, %s72
      %s89 = sphi 0, %s73
      %s95 = sphi 0, %s97
      %s98 = sphi 0, %s95
      %s99 = sphi 0, %s98
      %s115 = sphi 0, %s99
    $region4: #{tpu_custom_call.1} parent=1 // loop_header_branch
      %20 = sbr.rel (%p18) target = $region8
    $region5: #{tpu_custom_call.1} parent=1 // loop_body
      %s22 = ssub.s32 %s17, 1
      %s23 = ssub.s32 %s17, 2
      %s30 = sadd.s32 1, %s25
      %p31 = scmp.ge.s32.totalorder %s30, 1
      %s32 = scalar_select %p31, 0, %s30
      %s33 = sadd.s32 1, %s24
      %s34 = scalar_select %p31, %s33, %s24
      %p35 = scmp.ge.s32.totalorder %s34, 2
      %s36 = scalar_select %p35, 0, %s34
      %s37 = ssub.s32 %s24, %s36
      %s38 = ssub.s32 %s25, %s32
      %s39 = sor.u32 %s37, %s38
      %p40 = scmp.eq.s32.totalorder %s39, 0
      %s42 = sadd.s32 %s41, 1
      %s43 = scalar_select %p40, %s41, %s42
      %p46 = pneg %p40
      %p47 = scmp.eq.s32.totalorder %s17, 1
      %p48 = por %p46, %p47
      %p49 = scmp.ne.s32.totalorder %s41, %s44
      %p50 = scmp.eq.s32.totalorder %s17, 0
      %p51 = por %p49, %p50
      %p52 = scmp.ne.s32.totalorder %s41, %s44
      %p53 = scmp.eq.s32.totalorder %s22, 1
      %p54 = por %p52, %p53
      %p55 = scmp.ne.s32.totalorder %s44, %s45
      %p56 = scmp.eq.s32.totalorder %s22, 0
      %p57 = por %p55, %p56
      %p58 = scmp.ne.s32.totalorder %s44, %s45
      %p59 = scmp.eq.s32.totalorder %s23, 1
      %p60 = por %p58, %p59
      %p62 = scmp.ne.s32.totalorder %s45, %s61
      %p63 = scmp.eq.s32.totalorder %s23, 0
      %p64 = por %p62, %p63
      %s65 = ssub.s32 %s24, %s36
      %s66 = ssub.s32 %s25, %s32
      %s67 = sor.u32 %s65, %s66
      %p68 = scmp.eq.s32.totalorder %s67, 0
      %s70 = sadd.s32 %s69, 1
      %s71 = scalar_select %p68, %s69, %s70
      %p74 = pneg %p68
      %p75 = scmp.eq.s32.totalorder %s17, 1
      %p76 = por %p74, %p75
      %p77 = scmp.ne.s32.totalorder %s69, %s72
      %p78 = scmp.eq.s32.totalorder %s17, 0
      %p79 = por %p77, %p78
      %p80 = scmp.ne.s32.totalorder %s69, %s72
      %p81 = scmp.eq.s32.totalorder %s22, 1
      %p82 = por %p80, %p81
      %p83 = scmp.ne.s32.totalorder %s72, %s73
      %p84 = scmp.eq.s32.totalorder %s22, 0
      %p85 = por %p83, %p84
      %p86 = scmp.ne.s32.totalorder %s72, %s73
      %p87 = scmp.eq.s32.totalorder %s23, 1
      %p88 = por %p86, %p87
      %p90 = scmp.ne.s32.totalorder %s73, %s89
      %p91 = scmp.eq.s32.totalorder %s23, 0
      %p92 = por %p90, %p91
      %s93 = ssub.s32 %s24, %s36
      %p94 = scmp.eq.s32.totalorder %s93, 0
      %s96 = sadd.s32 %s95, 1
      %s97 = scalar_select %p94, %s95, %s96
      %p100 = pneg %p94
      %p101 = scmp.eq.s32.totalorder %s17, 1
      %p102 = por %p100, %p101
      %p103 = scmp.ne.s32.totalorder %s95, %s98
      %p104 = scmp.eq.s32.totalorder %s17, 0
      %p105 = por %p103, %p104
      %p106 = scmp.ne.s32.totalorder %s95, %s98
      %p107 = scmp.eq.s32.totalorder %s22, 1
      %p108 = por %p106, %p107
      %p109 = scmp.ne.s32.totalorder %s98, %s99
      %p110 = scmp.eq.s32.totalorder %s22, 0
      %p111 = por %p109, %p110
      %p112 = scmp.ne.s32.totalorder %s98, %s99
      %p113 = scmp.eq.s32.totalorder %s23, 1
      %p114 = por %p112, %p113
      %p116 = scmp.ne.s32.totalorder %s99, %s115
      %p117 = scmp.eq.s32.totalorder %s23, 0
      %p118 = por %p116, %p117
      %p119 = scmp.le.s32.totalorder 1, %s17
      %p120 = scmp.lt.s32.totalorder %s17, 3
      %p121 = pnand %p119, %p120
      %p122 = pneg %p121
      // Predicated region
      $region9: #{tpu_custom_call.1} parent=5 // pred_check
        _
      $region10: #{tpu_custom_call.1} parent=5 // pred_check_branch
        %124 = sbr.rel (%p121) target = $region12
      $region11: #{tpu_custom_call.1} parent=5 // pred_region
        %s125 = ssub.s32 %s17, 1
      $region12: #{tpu_custom_call.1} parent=5 // pred_fallthru
        _
      %p126 = scmp.lt.s32.totalorder %s17, 2
      // Predicated region
      $region13: #{tpu_custom_call.1} parent=5 // pred_check
        %p127 = pneg %p126
      $region14: #{tpu_custom_call.1} parent=5 // pred_check_branch
        %129 = sbr.rel (%p127) target = $region16
      $region15: #{tpu_custom_call.1} parent=5 // pred_region
        // Predicated region
        $region17: #{tpu_custom_call.1} parent=15 // pred_check
          %p130 = pneg %p51
        $region18: #{tpu_custom_call.1} parent=15 // pred_check_branch
          %132 = sbr.rel (%p130) target = $region20
        $region19: #{tpu_custom_call.1} parent=15 // pred_region
          %s133 = sand.u32 %s41, 1
          %s134 = scalar_lea.sflag [#allocation4], %s133
          %s135 = sand.u32 %s41, 1
          %s136 = smul.addr %s135, 8
          %s137 = scalar_lea.vmem [#allocation3], %s136
          %s139 = ssub.s32 128, 128
          %140 = vsyncadd %s134, %s139
          %s141 = sadd.s32 %s25, %s24
          %s142 = smul.addr %s141, 128
          %s143 = scalar_lea.hbm %s0, %s142
          %s145 = sshll.u32 %s137, 4
          %s146 = int_to_ptr.vmem [resolvable:$true] %s145
          %148 = dma.hbm_to_vmem [thread:$0]  %s143, 128, %s146, %s134
        $region20: #{tpu_custom_call.1} parent=15 // pred_fallthru
          _
        // Predicated region
        $region21: #{tpu_custom_call.1} parent=15 // pred_check
          %p149 = pneg %p79
        $region22: #{tpu_custom_call.1} parent=15 // pred_check_branch
          %151 = sbr.rel (%p149) target = $region24
        $region23: #{tpu_custom_call.1} parent=15 // pred_region
          %s152 = sand.u32 %s69, 1
          %s153 = scalar_lea.sflag [#allocation7], %s152
          %s154 = sand.u32 %s69, 1
          %s155 = smul.addr %s154, 8
          %s156 = scalar_lea.vmem [#allocation6], %s155
          %s158 = ssub.s32 128, 128
          %159 = vsyncadd %s153, %s158
          %s160 = sadd.s32 %s25, %s24
          %s161 = smul.addr %s160, 128
          %s162 = scalar_lea.hbm %s1, %s161
          %s164 = sshll.u32 %s156, 4
          %s165 = int_to_ptr.vmem [resolvable:$true] %s164
          %167 = dma.hbm_to_vmem [thread:$0]  %s162, 128, %s165, %s153
        $region24: #{tpu_custom_call.1} parent=15 // pred_fallthru
          _
      $region16: #{tpu_custom_call.1} parent=5 // pred_fallthru
        _
      %p168 = scmp.le.s32.totalorder 1, %s17
      %p169 = scmp.lt.s32.totalorder %s17, 3
      %p170 = pnand %p168, %p169
      %p171 = pneg %p170
      // Predicated region
      $region25: #{tpu_custom_call.1} parent=5 // pred_check
        _
      $region26: #{tpu_custom_call.1} parent=5 // pred_check_branch
        %173 = sbr.rel (%p170) target = $region28
      $region27: #{tpu_custom_call.1} parent=5 // pred_region
        %s174 = ssub.s32 %s17, 1
        %s175 = sand.u32 %s44, 1
        %s176 = scalar_lea.sflag [#allocation4], %s175
        %s177 = sand.u32 %s44, 1
        %s178 = smul.addr %s177, 8
        %s179 = scalar_lea.vmem [#allocation3], %s178
        // Predicated region
        $region29: #{tpu_custom_call.1} parent=27 // pred_check
          %p180 = pneg %p57
        $region30: #{tpu_custom_call.1} parent=27 // pred_check_branch
          %182 = sbr.rel (%p180) target = $region32
        $region31: #{tpu_custom_call.1} parent=27 // pred_region
          %183 = dma.done %s176, 128
        $region32: #{tpu_custom_call.1} parent=27 // pred_fallthru
          _
        %s184 = sand.u32 %s72, 1
        %s185 = scalar_lea.sflag [#allocation7], %s184
        %s186 = sand.u32 %s72, 1
        %s187 = smul.addr %s186, 8
        %s188 = scalar_lea.vmem [#allocation6], %s187
        // Predicated region
        $region33: #{tpu_custom_call.1} parent=27 // pred_check
          %p189 = pneg %p85
        $region34: #{tpu_custom_call.1} parent=27 // pred_check_branch
          %191 = sbr.rel (%p189) target = $region36
        $region35: #{tpu_custom_call.1} parent=27 // pred_region
          %192 = dma.done %s185, 128
        $region36: #{tpu_custom_call.1} parent=27 // pred_fallthru
          _
        %s193 = sand.u32 %s44, 1
        %s194 = scalar_lea.sflag [#allocation4], %s193
        %s195 = sand.u32 %s44, 1
        %s196 = smul.addr %s195, 8
        %s197 = scalar_lea.vmem [#allocation3], %s196
        %p198 = pneg %p57
        %p199 = pneg %p54
        %s200 = sand.u32 %s72, 1
        %s201 = scalar_lea.sflag [#allocation7], %s200
        %s202 = sand.u32 %s72, 1
        %s203 = smul.addr %s202, 8
        %s204 = scalar_lea.vmem [#allocation6], %s203
        %p205 = pneg %p85
        %p206 = pneg %p82
        %p207 = pneg %p111
        %p208 = pneg %p108
        %s209 = sand.u32 %s98, 1
        %s210 = scalar_lea.sflag [#allocation5], %s209
        %s211 = sand.u32 %s98, 1
        %s212 = smul.addr %s211, 8
        %s213 = scalar_lea.vmem [#allocation8], %s212
        %p214 = scmp.eq.s32.totalorder %s27, 0
        // Predicated region
        $region37: #{tpu_custom_call.1} parent=27 // pred_check
          %p215 = pneg %p214
        $region38: #{tpu_custom_call.1} parent=27 // pred_check_branch
          %217 = sbr.rel (%p215) target = $region40
        $region39: #{tpu_custom_call.1} parent=27 // pred_region
          %218 = vst [vmem:[#allocation2] sm:$0xff] 0.0
        $region40: #{tpu_custom_call.1} parent=27 // pred_fallthru
          _
        %v219 = vld [vmem:[%s179] sm:$0xff]
        %v220 = vadd.f32 %v219, 0.0
        %v221 = vld [vmem:[%s188] sm:$0xff]
        %v222 = vadd.f32 %v221, 0.0
        %v223 = vsub.f32 %v220, %v222
        %v224 = vld [vmem:[#allocation2] sm:$0xff]
        %v225 = vmul.f32 %v223, %v223
        %v226 = vadd.f32 %v225, 0.0
        %v227 = vadd.f32 %v224, %v226
        %228 = vst [vmem:[#allocation2] sm:$0xff] %v227
        // Predicated region
        $region41: #{tpu_custom_call.1} parent=27 // pred_check
          %p229 = pneg %p214
        $region42: #{tpu_custom_call.1} parent=27 // pred_check_branch
          %231 = sbr.rel (%p229) target = $region44
        $region43: #{tpu_custom_call.1} parent=27 // pred_region
          %v232 = vld [vmem:[#allocation2] sm:$0xff]
          %233 = vadd.xlane.f32.xlu0 %v232
          %v234 = vpop.xlane.xlu0 %233
          %v235 = vrot.slane %v234, 4
          %v236 = vadd.f32 %v234, %v235
          %v237 = vrot.slane %v236, 2
          %v238 = vadd.f32 %v236, %v237
          %v239 = vrot.slane %v238, 1
          %v240 = vadd.f32 %v238, %v239
          %s241 = vtos %v240
          %v242 = vstv %s241
          %243 = vst [vmem:[%s213] sm:$0xff] %v242
        $region44: #{tpu_custom_call.1} parent=27 // pred_fallthru
          _
        %s244 = sand.u32 %s98, 1
        %s245 = scalar_lea.sflag [#allocation5], %s244
        %s246 = sand.u32 %s98, 1
        %s247 = smul.addr %s246, 8
        %s248 = scalar_lea.vmem [#allocation8], %s247
        // Predicated region
        $region45: #{tpu_custom_call.1} parent=27 // pred_check
          %p249 = pneg %p108
        $region46: #{tpu_custom_call.1} parent=27 // pred_check_branch
          %251 = sbr.rel (%p249) target = $region48
        $region47: #{tpu_custom_call.1} parent=27 // pred_region
          %s253 = ssub.s32 128, 128
          %254 = vsyncadd %s245, %s253
          %s255 = smul.addr %s26, 128
          %s256 = scalar_lea.hbm %s2, %s255
          %s258 = sshll.u32 %s248, 4
          %s259 = int_to_ptr.vmem [resolvable:$true] %s258
          %261 = dma.vmem_to_hbm [thread:$0]  %s259, 128, %s256, %s245
        $region48: #{tpu_custom_call.1} parent=27 // pred_fallthru
          _
      $region28: #{tpu_custom_call.1} parent=5 // pred_fallthru
        _
      %p262 = scmp.le.s32.totalorder 2, %s17
      // Predicated region
      $region49: #{tpu_custom_call.1} parent=5 // pred_check
        %p263 = pneg %p262
      $region50: #{tpu_custom_call.1} parent=5 // pred_check_branch
        %265 = sbr.rel (%p263) target = $region52
      $region51: #{tpu_custom_call.1} parent=5 // pred_region
        %s266 = ssub.s32 %s17, 2
        // Predicated region
        $region53: #{tpu_custom_call.1} parent=51 // pred_check
          %p267 = pneg %p114
        $region54: #{tpu_custom_call.1} parent=51 // pred_check_branch
          %269 = sbr.rel (%p267) target = $region56
        $region55: #{tpu_custom_call.1} parent=51 // pred_region
          %s270 = sand.u32 %s99, 1
          %s271 = scalar_lea.sflag [#allocation5], %s270
          %s272 = sand.u32 %s99, 1
          %s273 = smul.addr %s272, 8
          %s274 = scalar_lea.vmem [#allocation8], %s273
          %275 = dma.done %s271, 128
        $region56: #{tpu_custom_call.1} parent=51 // pred_fallthru
          _
      $region52: #{tpu_custom_call.1} parent=5 // pred_fallthru
        _
    $region6: #{tpu_custom_call.1} parent=1 // loop_footer
      %s21 = sadd.s32 1, %s17
    $region7: #{tpu_custom_call.1} parent=1 // loop_footer_branch
      %16 = sbr.rel target = $region3
    $region8: #{tpu_custom_call.1} parent=1 // loop_exit
      _
    %276 = vsyncpa [#allocation4], 1
    %s277 = scalar_lea.sflag [#allocation4], 1
    %278 = vsyncpa %s277, 1
    %279 = vsyncpa [#allocation7], 1
    %s280 = scalar_lea.sflag [#allocation7], 1
    %281 = vsyncpa %s280, 1
    %282 = vsyncpa [#allocation5], 1
    %s283 = scalar_lea.sflag [#allocation5], 1
    %284 = vsyncpa %s283, 1

</llo_original>
